<compile_context>
chip_gen: v7x
topology: tpu7x:2x2x1
jax: 0.10.0
libtpu: 0.0.40
codegen_flags: <defaults>
</compile_context>

<pallas_src>
import math

import jax
import jax.numpy as jnp
from jax import lax
from jax.experimental import pallas as pl
from jax.experimental.pallas import tpu as pltpu


_HID = 64   # hidden channels of the first conv
_OUT = 2    # output channels of the 1x1 conv


def _round_up(x, m):
    return ((x + m - 1) // m) * m


def offset_predictor_forward(X, W1, b1, W2, b2, *, patch_size, stride,
                             tm=8192, use_bf16_inputs=False,
                             approximate_gelu=False):
    """OffsetPredictor (mod=0) forward.  X: (B, C, L) -> (B, L_out, 2) f32."""
    B, C, L = X.shape
    P, S = int(patch_size), int(stride)
    L_out = (L - P) // S + 1
    if L_out < 1:
        raise ValueError("sequence too short for patch_size/stride")
    K = C * P

    # --- tiling ---------------------------------------------------------------
    n_shift = (P - 1) // S                       # max tap shift in de-interleaved T
    HALO = max(128, _round_up(max(n_shift, 1), 128))
    itemsize = 2 if use_bf16_inputs else 4
    # Rough live-VMEM bytes per output column (double-buffered inputs, patches,
    # h / GELU intermediates, output); keeps each tile under ~20 MiB so the
    # 48 MiB scoped limit below is safe on every generation (v7x: 64 MiB phys).
    bytes_per_col = 3 * C * S * itemsize + 3 * K * itemsize + 2 * _HID * 4 + 64
    budget = 20 * 1024 * 1024
    tl_cap = max(HALO, (budget // bytes_per_col) // HALO * HALO)
    TL = min(_round_up(min(int(tm), L_out), HALO), tl_cap)      # multiple of HALO
    L_out_pad = _round_up(L_out, TL)
    NT = L_out_pad // TL
    T_pad = L_out_pad + HALO                     # halo block of last tile stays in-bounds
    L_pad = T_pad * S

    # --- wrapper-side prep (cheap; NO im2col duplication) ----------------------
    x = X.astype(jnp.bfloat16) if use_bf16_inputs else X.astype(jnp.float32)
    x = jnp.pad(x, ((0, 0), (0, 0), (0, L_pad - L)))
    # stride-phase de-interleave: x_d[b, r, c, t] = x[b, c, t*S + r]
    x_d = x.reshape(B, C, T_pad, S).transpose(0, 3, 1, 2)       # (B, S, C, T_pad)

    # Conv weights, (p, c)-flattened so the in-kernel tap slices concatenate
    # directly into the matmul RHS ordering.
    w1 = W1.transpose(0, 2, 1).reshape(_HID, K)                 # (64, K)
    w1 = w1.astype(jnp.bfloat16) if use_bf16_inputs else w1.astype(jnp.float32)
    w2 = W2.reshape(_OUT, _HID).astype(jnp.float32)             # (2, 64)
    b1_ = b1.reshape(_HID, 1).astype(jnp.float32)
    b2_ = b2.reshape(_OUT, 1).astype(jnp.float32)

    inv_sqrt2 = 1.0 / math.sqrt(2.0)
    tanh_c = math.sqrt(2.0 / math.pi)

    def kernel(xa_ref, xb_ref, w1_ref, b1_ref, w2_ref, b2_ref, out_ref):
        # xa: (1, S, C, TL) main tile of de-interleaved X; xb: (1, S, C, HALO)
        # halo (head of the next tile).  Build the (K, TL) patch block in VMEM.
        fulls = [None] * S
        slices = []
        for p in range(P):                       # static tap loop
            r, s = p % S, p // S
            if s == 0:
                sl = xa_ref[0, r]                # (C, TL), contiguous
            else:
                if fulls[r] is None:
                    fulls[r] = jnp.concatenate([xa_ref[0, r], xb_ref[0, r]],
                                               axis=-1)          # (C, TL+HALO)
                # left-shift by s columns via an XLU rotate, then aligned slice
                rolled = pltpu.roll(fulls[r], shift=(TL + HALO) - s, axis=1)
                sl = rolled[:, :TL]
            slices.append(sl)
        patches = (jnp.concatenate(slices, axis=0) if len(slices) > 1
                   else slices[0])               # (K, TL)

        h = jnp.dot(w1_ref[...], patches, preferred_element_type=jnp.float32)
        h = h + b1_ref[...]
        if approximate_gelu:
            # tanh form -> transcendental lands on the EUP slot
            g = 0.5 * h * (1.0 + jnp.tanh(tanh_c * (h + 0.044715 * h * h * h)))
        else:
            # exact erf GELU == torch.nn.GELU() default
            g = 0.5 * h * (1.0 + lax.erf(h * inv_sqrt2))
        o = jnp.dot(w2_ref[...], g, preferred_element_type=jnp.float32)
        o = o + b2_ref[...]
        out_ref[0] = o.astype(out_ref.dtype)     # lane-dense (2, TL) store

    # TODO(synk): on v7x, consider pltpu.CORE_PARALLEL / core_map for an explicit
    # 2-TensorCore split of the column axis; "parallel" is the portable choice.
    out = pl.pallas_call(
        kernel,
        out_shape=jax.ShapeDtypeStruct((B, _OUT, L_out_pad), jnp.float32),
        grid=(B, NT),
        in_specs=[
            pl.BlockSpec((1, S, C, TL), lambda b, j: (b, 0, 0, j)),
            pl.BlockSpec((1, S, C, HALO),
                         lambda b, j: (b, 0, 0, (j + 1) * (TL // HALO))),
            pl.BlockSpec((_HID, K), lambda b, j: (0, 0)),        # resident weights
            pl.BlockSpec((_HID, 1), lambda b, j: (0, 0)),
            pl.BlockSpec((_OUT, _HID), lambda b, j: (0, 0)),
            pl.BlockSpec((_OUT, 1), lambda b, j: (0, 0)),
        ],
        out_specs=pl.BlockSpec((1, _OUT, TL), lambda b, j: (b, 0, j)),
        compiler_params=pltpu.CompilerParams(
            dimension_semantics=("parallel", "parallel"),
            vmem_limit_bytes=48 * 1024 * 1024,
        ),
    )(x_d, x_d, w1, b1_, w2, b2_)

    out = out[:, :, :L_out]                      # drop padded columns
    return jnp.transpose(out, (0, 2, 1))         # (B, L_out, 2)


def _reference_forward(X, W1, b1, W2, b2, *, patch_size, stride):
    """Pure-JAX reference of the same PyTorch forward, for a sanity check."""
    y = lax.conv_general_dilated(
        X, W1, window_strides=(stride,), padding="VALID",
        dimension_numbers=("NCH", "OIH", "NCH"))
    y = y + b1[None, :, None]
    y = y * 0.5 * (1.0 + lax.erf(y / math.sqrt(2.0)))
    y = lax.conv_general_dilated(
        y, W2, window_strides=(1,), padding="VALID",
        dimension_numbers=("NCH", "OIH", "NCH"))
    y = y + b2[None, :, None]
    return jnp.transpose(y, (0, 2, 1))


if __name__ == "__main__":
    # Small shapes consistent with the module: X is (B, in_feats, L).
    B, in_feats, L = 2, 4, 16
    patch_size, stride = 4, 2

    key = jax.random.PRNGKey(0)
    kx, k1, kb1, k2, kb2 = jax.random.split(key, 5)

    X = jax.random.normal(kx, (B, in_feats, L), dtype=jnp.float32)

    # Parameter shapes per nn.Conv1d layers in __init__ (mod=0).
    W1 = 0.1 * jax.random.normal(k1, (64, in_feats, patch_size), dtype=jnp.float32)
    b1 = 0.1 * jax.random.normal(kb1, (64,), dtype=jnp.float32)
    W2 = 0.1 * jax.random.normal(k2, (2, 64, 1), dtype=jnp.float32)
    b2 = 0.1 * jax.random.normal(kb2, (2,), dtype=jnp.float32)

    L_out = (L - patch_size) // stride + 1
    ref = _reference_forward(X, W1, b1, W2, b2,
                             patch_size=patch_size, stride=stride)

    # Default path: f32 end-to-end, exact erf GELU (matches torch.nn.GELU()).
    out = offset_predictor_forward(X, W1, b1, W2, b2,
                                   patch_size=patch_size, stride=stride)
    out = jax.block_until_ready(out)
    assert out.shape == (B, L_out, 2), out.shape
    assert jnp.allclose(out, ref, atol=1e-4, rtol=1e-4), "f32 mismatch vs reference"

    # bf16-input fast path (halves HBM bytes on the dominant operand; f32 accum).
    out_bf16 = offset_predictor_forward(X, W1, b1, W2, b2,
                                        patch_size=patch_size, stride=stride,
                                        use_bf16_inputs=True)
    out_bf16 = jax.block_until_ready(out_bf16)
    assert out_bf16.shape == (B, L_out, 2), out_bf16.shape
    assert jnp.allclose(out_bf16, ref, atol=5e-2, rtol=5e-2), "bf16 mismatch"

    # tanh-approx GELU fast path (transcendental on the EUP slot).
    out_tanh = offset_predictor_forward(X, W1, b1, W2, b2,
                                        patch_size=patch_size, stride=stride,
                                        approximate_gelu=True)
    out_tanh = jax.block_until_ready(out_tanh)
    assert jnp.allclose(out_tanh, ref, atol=5e-2, rtol=5e-2), "tanh-gelu mismatch"

    print("KERNEL_OK")
</pallas_src>

<mosaic_0001>
module attributes {stable_mosaic.version = 11 : i64} {
  func.func @kernel(%arg0: i32, %arg1: i32, %arg2: memref<1x2x4x128xf32, #tpu.memory_space<vmem>>, %arg3: memref<1x2x4x128xf32, #tpu.memory_space<vmem>>, %arg4: memref<64x16xf32, #tpu.memory_space<vmem>>, %arg5: memref<64x1xf32, #tpu.memory_space<vmem>>, %arg6: memref<2x64xf32, #tpu.memory_space<vmem>>, %arg7: memref<2x1xf32, #tpu.memory_space<vmem>>, %arg8: memref<1x2x128xf32, #tpu.memory_space<vmem>>) attributes {dimension_semantics = [#tpu.dimension_semantics<parallel>, #tpu.dimension_semantics<parallel>], iteration_bounds = array<i64: 2, 1>, scalar_prefetch = 0 : i64, scratch_operands = 0 : i64, tpu.core_type = #tpu.core_type<tc>, window_params = [{transform_indices = @transform_0, window_bounds = array<i64: 1, 2, 4, 128>}, {transform_indices = @transform_1, window_bounds = array<i64: 1, 2, 4, 128>}, {pipeline_mode = #tpu.pipeline_mode<synchronous>, transform_indices = @transform_2, window_bounds = array<i64: 64, 16>}, {pipeline_mode = #tpu.pipeline_mode<synchronous>, transform_indices = @transform_3, window_bounds = array<i64: 64, 1>}, {pipeline_mode = #tpu.pipeline_mode<synchronous>, transform_indices = @transform_4, window_bounds = array<i64: 2, 64>}, {pipeline_mode = #tpu.pipeline_mode<synchronous>, transform_indices = @transform_5, window_bounds = array<i64: 2, 1>}, {transform_indices = @transform_6, window_bounds = array<i64: 1, 2, 128>}]} {
    %c0 = arith.constant 0 : index
    %c0_0 = arith.constant 0 : index
    %c0_1 = arith.constant 0 : index
    %c0_2 = arith.constant 0 : index
    %0 = vector.load %arg2[%c0, %c0_0, %c0_1, %c0_2] : memref<1x2x4x128xf32, #tpu.memory_space<vmem>>, vector<1x1x4x128xf32>
    %1 = vector.shape_cast %0 : vector<1x1x4x128xf32> to vector<4x128xf32>
    %c0_3 = arith.constant 0 : index
    %c1 = arith.constant 1 : index
    %c0_4 = arith.constant 0 : index
    %c0_5 = arith.constant 0 : index
    %2 = vector.load %arg2[%c0_3, %c1, %c0_4, %c0_5] : memref<1x2x4x128xf32, #tpu.memory_space<vmem>>, vector<1x1x4x128xf32>
    %3 = vector.shape_cast %2 : vector<1x1x4x128xf32> to vector<4x128xf32>
    %c0_6 = arith.constant 0 : index
    %c0_7 = arith.constant 0 : index
    %c0_8 = arith.constant 0 : index
    %c0_9 = arith.constant 0 : index
    %4 = vector.load %arg2[%c0_6, %c0_7, %c0_8, %c0_9] : memref<1x2x4x128xf32, #tpu.memory_space<vmem>>, vector<1x1x4x128xf32>
    %5 = vector.shape_cast %4 : vector<1x1x4x128xf32> to vector<4x128xf32>
    %c0_10 = arith.constant 0 : index
    %c0_11 = arith.constant 0 : index
    %c0_12 = arith.constant 0 : index
    %c0_13 = arith.constant 0 : index
    %6 = vector.load %arg3[%c0_10, %c0_11, %c0_12, %c0_13] : memref<1x2x4x128xf32, #tpu.memory_space<vmem>>, vector<1x1x4x128xf32>
    %7 = vector.shape_cast %6 : vector<1x1x4x128xf32> to vector<4x128xf32>
    %8 = tpu.concatenate %5, %7 in 1 : vector<4x128xf32>, vector<4x128xf32> -> vector<4x256xf32>
    %c255_i32 = arith.constant 255 : i32
    %9 = tpu.dynamic_rotate %8 by %c255_i32 dim 1 : vector<4x256xf32>, i32 -> vector<4x256xf32>
    %10 = vector.extract_strided_slice %9 {offsets = [0, 0], sizes = [4, 128], strides = [1, 1]} : vector<4x256xf32> to vector<4x128xf32>
    %c0_14 = arith.constant 0 : index
    %c1_15 = arith.constant 1 : index
    %c0_16 = arith.constant 0 : index
    %c0_17 = arith.constant 0 : index
    %11 = vector.load %arg2[%c0_14, %c1_15, %c0_16, %c0_17] : memref<1x2x4x128xf32, #tpu.memory_space<vmem>>, vector<1x1x4x128xf32>
    %12 = vector.shape_cast %11 : vector<1x1x4x128xf32> to vector<4x128xf32>
    %c0_18 = arith.constant 0 : index
    %c1_19 = arith.constant 1 : index
    %c0_20 = arith.constant 0 : index
    %c0_21 = arith.constant 0 : index
    %13 = vector.load %arg3[%c0_18, %c1_19, %c0_20, %c0_21] : memref<1x2x4x128xf32, #tpu.memory_space<vmem>>, vector<1x1x4x128xf32>
    %14 = vector.shape_cast %13 : vector<1x1x4x128xf32> to vector<4x128xf32>
    %15 = tpu.concatenate %12, %14 in 1 : vector<4x128xf32>, vector<4x128xf32> -> vector<4x256xf32>
    %c255_i32_22 = arith.constant 255 : i32
    %16 = tpu.dynamic_rotate %15 by %c255_i32_22 dim 1 : vector<4x256xf32>, i32 -> vector<4x256xf32>
    %17 = vector.extract_strided_slice %16 {offsets = [0, 0], sizes = [4, 128], strides = [1, 1]} : vector<4x256xf32> to vector<4x128xf32>
    %18 = tpu.concatenate %1, %3, %10, %17 in 0 : vector<4x128xf32>, vector<4x128xf32>, vector<4x128xf32>, vector<4x128xf32> -> vector<16x128xf32>
    %c0_23 = arith.constant 0 : index
    %c0_24 = arith.constant 0 : index
    %19 = vector.load %arg4[%c0_23, %c0_24] : memref<64x16xf32, #tpu.memory_space<vmem>>, vector<64x16xf32>
    %cst = arith.constant dense<0.000000e+00> : vector<64x128xf32>
    %20 = tpu.matmul %19, %18, %cst {dimension_numbers = #tpu.dot_dimension_numbers<[1], [0], [0], [1], [0, 0, 1, 1], [], []>} : vector<64x16xf32>, vector<16x128xf32>, vector<64x128xf32> -> vector<64x128xf32>
    %c0_25 = arith.constant 0 : index
    %c0_26 = arith.constant 0 : index
    %21 = vector.load %arg5[%c0_25, %c0_26] : memref<64x1xf32, #tpu.memory_space<vmem>>, vector<64x1xf32>
    %22 = vector.broadcast %21 : vector<64x1xf32> to vector<64x128xf32>
    %23 = arith.addf %20, %22 : vector<64x128xf32>
    %cst_27 = arith.constant 5.000000e-01 : f32
    %24 = vector.broadcast %cst_27 : f32 to vector<64x128xf32>
    %25 = arith.mulf %24, %23 : vector<64x128xf32>
    %cst_28 = arith.constant 0.707106769 : f32
    %26 = vector.broadcast %cst_28 : f32 to vector<64x128xf32>
    %27 = arith.mulf %23, %26 : vector<64x128xf32>
    %28 = math.erf %27 : vector<64x128xf32>
    %cst_29 = arith.constant 1.000000e+00 : f32
    %29 = vector.broadcast %cst_29 : f32 to vector<64x128xf32>
    %30 = arith.addf %29, %28 : vector<64x128xf32>
    %31 = arith.mulf %25, %30 : vector<64x128xf32>
    %c0_30 = arith.constant 0 : index
    %c0_31 = arith.constant 0 : index
    %32 = vector.load %arg6[%c0_30, %c0_31] : memref<2x64xf32, #tpu.memory_space<vmem>>, vector<2x64xf32>
    %cst_32 = arith.constant dense<0.000000e+00> : vector<2x128xf32>
    %33 = tpu.matmul %32, %31, %cst_32 {dimension_numbers = #tpu.dot_dimension_numbers<[1], [0], [0], [1], [0, 0, 1, 1], [], []>} : vector<2x64xf32>, vector<64x128xf32>, vector<2x128xf32> -> vector<2x128xf32>
    %c0_33 = arith.constant 0 : index
    %c0_34 = arith.constant 0 : index
    %34 = vector.load %arg7[%c0_33, %c0_34] : memref<2x1xf32, #tpu.memory_space<vmem>>, vector<2x1xf32>
    %35 = vector.broadcast %34 : vector<2x1xf32> to vector<2x128xf32>
    %36 = arith.addf %33, %35 : vector<2x128xf32>
    %c0_35 = arith.constant 0 : index
    %c0_36 = arith.constant 0 : index
    %c0_37 = arith.constant 0 : index
    %37 = vector.load %arg8[%c0_35, %c0_36, %c0_37] : memref<1x2x128xf32, #tpu.memory_space<vmem>>, vector<1x2x128xf32>
    %38 = vector.shape_cast %37 : vector<1x2x128xf32> to vector<2x128xf32>
    %39 = vector.shape_cast %36 : vector<2x128xf32> to vector<1x2x128xf32>
    tpu.vector_store %arg8[%c0_35, %c0_36, %c0_37], %39 {strides = array<i32>} : memref<1x2x128xf32, #tpu.memory_space<vmem>>, vector<1x2x128xf32>,
    return
  }
  func.func @transform_0(%arg0: i32, %arg1: i32) -> (i32, i32, i32, i32) {
    %c0_i32 = arith.constant 0 : i32
    %c0_i32_0 = arith.constant 0 : i32
    %c0_i32_1 = arith.constant 0 : i32
    return %arg0, %c0_i32, %c0_i32_0, %arg1 : i32, i32, i32, i32
  }
  func.func @transform_1(%arg0: i32, %arg1: i32) -> (i32, i32, i32, i32) {
    %c1_i32 = arith.constant 1 : i32
    %0 = arith.addi %arg1, %c1_i32 : i32
    %c1_i32_0 = arith.constant 1 : i32
    %1 = arith.muli %0, %c1_i32_0 : i32
    %c0_i32 = arith.constant 0 : i32
    %c0_i32_1 = arith.constant 0 : i32
    %c0_i32_2 = arith.constant 0 : i32
    return %arg0, %c0_i32, %c0_i32_1, %1 : i32, i32, i32, i32
  }
  func.func @transform_2(%arg0: i32, %arg1: i32) -> (i32, i32) {
    %c0_i32 = arith.constant 0 : i32
    %c0_i32_0 = arith.constant 0 : i32
    %c0_i32_1 = arith.constant 0 : i32
    return %c0_i32, %c0_i32_0 : i32, i32
  }
  func.func @transform_3(%arg0: i32, %arg1: i32) -> (i32, i32) {
    %c0_i32 = arith.constant 0 : i32
    %c0_i32_0 = arith.constant 0 : i32
    %c0_i32_1 = arith.constant 0 : i32
    return %c0_i32, %c0_i32_0 : i32, i32
  }
  func.func @transform_4(%arg0: i32, %arg1: i32) -> (i32, i32) {
    %c0_i32 = arith.constant 0 : i32
    %c0_i32_0 = arith.constant 0 : i32
    %c0_i32_1 = arith.constant 0 : i32
    return %c0_i32, %c0_i32_0 : i32, i32
  }
  func.func @transform_5(%arg0: i32, %arg1: i32) -> (i32, i32) {
    %c0_i32 = arith.constant 0 : i32
    %c0_i32_0 = arith.constant 0 : i32
    %c0_i32_1 = arith.constant 0 : i32
    return %c0_i32, %c0_i32_0 : i32, i32
  }
  func.func @transform_6(%arg0: i32, %arg1: i32) -> (i32, i32, i32) {
    %c0_i32 = arith.constant 0 : i32
    %c0_i32_0 = arith.constant 0 : i32
    return %arg0, %c0_i32, %arg1 : i32, i32, i32
  }
}

</mosaic_0001>

<llo_original>
// kernel: tpu_custom_call.1
$region0: #{tpu_custom_call.1}
  #allocation0 [shape = 'u32[]', space=smem, size = 0x4, offset = 0x4, fixed_abs, tag = 'smem constant byte address 0x4 - core index']
  #allocation1 [shape = 'u32[144,128]{1,0:T(1,128)}', space=vmem, size = 0x12000, scoped, tag = 'internal scratch']
  %s0 = inlined_call_operand.vmem [shape: f32[2,2,4,256], index: 0, kind: input, shape index: {}]
  %s1 = inlined_call_operand.vmem [shape: f32[2,2,4,256], index: 1, kind: input, shape index: {}]
  %s2 = inlined_call_operand.vmem [shape: f32[64,16], index: 2, kind: input, shape index: {}]
  %s3 = inlined_call_operand.vmem [shape: f32[64,1], index: 3, kind: input, shape index: {}]
  %s4 = inlined_call_operand.vmem [shape: f32[2,64], index: 4, kind: input, shape index: {}]
  %s5 = inlined_call_operand.vmem [shape: f32[2,1], index: 5, kind: input, shape index: {}]
  %s6 = inlined_call_operand.hbm [shape: f32[2,2,128], index: 6, kind: output, shape index: {}]
  %s7 = sld [smem:[#allocation0]]
  $region139: #{tpu_custom_call.1} parent=0
    _
  %s9 = ssub.s32 1, %s7
  %s10 = scalar_select 0, %s9, %s7
  $region1: #{tpu_custom_call.1} parent=0
    #allocation2 [shape = 'u8[8192]{0}', space=vmem, size = 0x2000, scoped, tag = 'input window, operand 0']
    #allocation3 [shape = 'u8[8192]{0}', space=vmem, size = 0x2000, scoped, tag = 'input window, operand 1']
    #allocation4 [shape = 'u8[2048]{0}', space=vmem, size = 0x800, scoped, tag = 'output window, operand 0']
    #allocation5 [shape = 's32[2]{0}', space=sflag, size = 0x8, scoped, tag = 'scoped memory for tpu_custom_call.1']
    %11 = vsyncpa [#allocation5], 0
    %s12 = scalar_lea.sflag [#allocation5], 1
    %13 = vsyncpa %s12, 0
    loop: start=0, step=1, limit=4
    $region2: #{tpu_custom_call.1} parent=1 // loop_pre_header
      _
    $region3: #{tpu_custom_call.1} parent=1 // loop_header
      %s15 = sphi 0, %s19
      %p16 = scmp.ge.s32.totalorder %s15, 4
      %s22 = sphi 0, %s34
      %s23 = sphi 0, %s30
      %s24 = sphi 0, %s22
      %s25 = sphi 0, %s23
      %s26 = sphi 0, %s24
      %s27 = sphi 0, %s25
      %s39 = sphi 0, %s41
      %s42 = sphi 0, %s39
      %s43 = sphi 0, %s42
      %s59 = sphi 0, %s43
      %s69 = sphi 0, %s71
      %s72 = sphi 0, %s69
      %s73 = sphi 0, %s72
      %s89 = sphi 0, %s73
      %s93 = sphi 0, %s93
      %s95 = sphi 0, %s93
      %s96 = sphi 0, %s95
      %s110 = sphi 0, %s96
      %s114 = sphi 0, %s114
      %s116 = sphi 0, %s114
      %s117 = sphi 0, %s116
      %s131 = sphi 0, %s117
      %s135 = sphi 0, %s135
      %s137 = sphi 0, %s135
      %s138 = sphi 0, %s137
      %s152 = sphi 0, %s138
      %s156 = sphi 0, %s156
      %s158 = sphi 0, %s156
      %s159 = sphi 0, %s158
      %s173 = sphi 0, %s159
      %s181 = sphi 0, %s183
      %s184 = sphi 0, %s181
      %s185 = sphi 0, %s184
      %s201 = sphi 0, %s185
    $region4: #{tpu_custom_call.1} parent=1 // loop_header_branch
      %18 = sbr.rel (%p16) target = $region8
    $region5: #{tpu_custom_call.1} parent=1 // loop_body
      %s20 = ssub.s32 %s15, 1
      %s21 = ssub.s32 %s15, 2
      %s28 = sadd.s32 1, %s23
      %p29 = scmp.ge.s32.totalorder %s28, 1
      %s30 = scalar_select %p29, 0, %s28
      %s31 = sadd.s32 1, %s22
      %s32 = scalar_select %p29, %s31, %s22
      %p33 = scmp.ge.s32.totalorder %s32, 2
      %s34 = scalar_select %p33, 0, %s32
      %s35 = ssub.s32 %s22, %s34
      %s36 = ssub.s32 %s23, %s30
      %s37 = sor.u32 %s35, %s36
      %p38 = scmp.eq.s32.totalorder %s37, 0
      %s40 = sadd.s32 %s39, 1
      %s41 = scalar_select %p38, %s39, %s40
      %p44 = pneg %p38
      %p45 = scmp.eq.s32.totalorder %s15, 1
      %p46 = por %p44, %p45
      %p47 = scmp.ne.s32.totalorder %s39, %s42
      %p48 = scmp.eq.s32.totalorder %s15, 0
      %p49 = por %p47, %p48
      %p50 = scmp.ne.s32.totalorder %s39, %s42
      %p51 = scmp.eq.s32.totalorder %s20, 1
      %p52 = por %p50, %p51
      %p53 = scmp.ne.s32.totalorder %s42, %s43
      %p54 = scmp.eq.s32.totalorder %s20, 0
      %p55 = por %p53, %p54
      %p56 = scmp.ne.s32.totalorder %s42, %s43
      %p57 = scmp.eq.s32.totalorder %s21, 1
      %p58 = por %p56, %p57
      %p60 = scmp.ne.s32.totalorder %s43, %s59
      %p61 = scmp.eq.s32.totalorder %s21, 0
      %p62 = por %p60, %p61
      %s63 = sadd.s32 %s23, 1
      %s64 = sadd.s32 %s30, 1
      %s65 = ssub.s32 %s22, %s34
      %s66 = ssub.s32 %s63, %s64
      %s67 = sor.u32 %s65, %s66
      %p68 = scmp.eq.s32.totalorder %s67, 0
      %s70 = sadd.s32 %s69, 1
      %s71 = scalar_select %p68, %s69, %s70
      %p74 = pneg %p68
      %p75 = scmp.eq.s32.totalorder %s15, 1
      %p76 = por %p74, %p75
      %p77 = scmp.ne.s32.totalorder %s69, %s72
      %p78 = scmp.eq.s32.totalorder %s15, 0
      %p79 = por %p77, %p78
      %p80 = scmp.ne.s32.totalorder %s69, %s72
      %p81 = scmp.eq.s32.totalorder %s20, 1
      %p82 = por %p80, %p81
      %p83 = scmp.ne.s32.totalorder %s72, %s73
      %p84 = scmp.eq.s32.totalorder %s20, 0
      %p85 = por %p83, %p84
      %p86 = scmp.ne.s32.totalorder %s72, %s73
      %p87 = scmp.eq.s32.totalorder %s21, 1
      %p88 = por %p86, %p87
      %p90 = scmp.ne.s32.totalorder %s73, %s89
      %p91 = scmp.eq.s32.totalorder %s21, 0
      %p92 = por %p90, %p91
      %s94 = sadd.s32 %s93, 1
      %p97 = scmp.eq.s32.totalorder %s15, 1
      %p98 = scmp.ne.s32.totalorder %s93, %s95
      %p99 = scmp.eq.s32.totalorder %s15, 0
      %p100 = por %p98, %p99
      %p101 = scmp.ne.s32.totalorder %s93, %s95
      %p102 = scmp.eq.s32.totalorder %s20, 1
      %p103 = por %p101, %p102
      %p104 = scmp.ne.s32.totalorder %s95, %s96
      %p105 = scmp.eq.s32.totalorder %s20, 0
      %p106 = por %p104, %p105
      %p107 = scmp.ne.s32.totalorder %s95, %s96
      %p108 = scmp.eq.s32.totalorder %s21, 1
      %p109 = por %p107, %p108
      %p111 = scmp.ne.s32.totalorder %s96, %s110
      %p112 = scmp.eq.s32.totalorder %s21, 0
      %p113 = por %p111, %p112
      %s115 = sadd.s32 %s114, 1
      %p118 = scmp.eq.s32.totalorder %s15, 1
      %p119 = scmp.ne.s32.totalorder %s114, %s116
      %p120 = scmp.eq.s32.totalorder %s15, 0
      %p121 = por %p119, %p120
      %p122 = scmp.ne.s32.totalorder %s114, %s116
      %p123 = scmp.eq.s32.totalorder %s20, 1
      %p124 = por %p122, %p123
      %p125 = scmp.ne.s32.totalorder %s116, %s117
      %p126 = scmp.eq.s32.totalorder %s20, 0
      %p127 = por %p125, %p126
      %p128 = scmp.ne.s32.totalorder %s116, %s117
      %p129 = scmp.eq.s32.totalorder %s21, 1
      %p130 = por %p128, %p129
      %p132 = scmp.ne.s32.totalorder %s117, %s131
      %p133 = scmp.eq.s32.totalorder %s21, 0
      %p134 = por %p132, %p133
      %s136 = sadd.s32 %s135, 1
      %p139 = scmp.eq.s32.totalorder %s15, 1
      %p140 = scmp.ne.s32.totalorder %s135, %s137
      %p141 = scmp.eq.s32.totalorder %s15, 0
      %p142 = por %p140, %p141
      %p143 = scmp.ne.s32.totalorder %s135, %s137
      %p144 = scmp.eq.s32.totalorder %s20, 1
      %p145 = por %p143, %p144
      %p146 = scmp.ne.s32.totalorder %s137, %s138
      %p147 = scmp.eq.s32.totalorder %s20, 0
      %p148 = por %p146, %p147
      %p149 = scmp.ne.s32.totalorder %s137, %s138
      %p150 = scmp.eq.s32.totalorder %s21, 1
      %p151 = por %p149, %p150
      %p153 = scmp.ne.s32.totalorder %s138, %s152
      %p154 = scmp.eq.s32.totalorder %s21, 0
      %p155 = por %p153, %p154
      %s157 = sadd.s32 %s156, 1
      %p160 = scmp.eq.s32.totalorder %s15, 1
      %p161 = scmp.ne.s32.totalorder %s156, %s158
      %p162 = scmp.eq.s32.totalorder %s15, 0
      %p163 = por %p161, %p162
      %p164 = scmp.ne.s32.totalorder %s156, %s158
      %p165 = scmp.eq.s32.totalorder %s20, 1
      %p166 = por %p164, %p165
      %p167 = scmp.ne.s32.totalorder %s158, %s159
      %p168 = scmp.eq.s32.totalorder %s20, 0
      %p169 = por %p167, %p168
      %p170 = scmp.ne.s32.totalorder %s158, %s159
      %p171 = scmp.eq.s32.totalorder %s21, 1
      %p172 = por %p170, %p171
      %p174 = scmp.ne.s32.totalorder %s159, %s173
      %p175 = scmp.eq.s32.totalorder %s21, 0
      %p176 = por %p174, %p175
      %s177 = ssub.s32 %s22, %s34
      %s178 = ssub.s32 %s23, %s30
      %s179 = sor.u32 %s177, %s178
      %p180 = scmp.eq.s32.totalorder %s179, 0
      %s182 = sadd.s32 %s181, 1
      %s183 = scalar_select %p180, %s181, %s182
      %p186 = pneg %p180
      %p187 = scmp.eq.s32.totalorder %s15, 1
      %p188 = por %p186, %p187
      %p189 = scmp.ne.s32.totalorder %s181, %s184
      %p190 = scmp.eq.s32.totalorder %s15, 0
      %p191 = por %p189, %p190
      %p192 = scmp.ne.s32.totalorder %s181, %s184
      %p193 = scmp.eq.s32.totalorder %s20, 1
      %p194 = por %p192, %p193
      %p195 = scmp.ne.s32.totalorder %s184, %s185
      %p196 = scmp.eq.s32.totalorder %s20, 0
      %p197 = por %p195, %p196
      %p198 = scmp.ne.s32.totalorder %s184, %s185
      %p199 = scmp.eq.s32.totalorder %s21, 1
      %p200 = por %p198, %p199
      %p202 = scmp.ne.s32.totalorder %s185, %s201
      %p203 = scmp.eq.s32.totalorder %s21, 0
      %p204 = por %p202, %p203
      %p205 = scmp.le.s32.totalorder 1, %s15
      %p206 = scmp.lt.s32.totalorder %s15, 3
      %p207 = pnand %p205, %p206
      %p208 = pneg %p207
      // Predicated region
      $region9: #{tpu_custom_call.1} parent=5 // pred_check
        _
      $region10: #{tpu_custom_call.1} parent=5 // pred_check_branch
        %210 = sbr.rel (%p207) target = $region12
      $region11: #{tpu_custom_call.1} parent=5 // pred_region
        %s211 = ssub.s32 %s15, 1
        // Predicated region
        $region13: #{tpu_custom_call.1} parent=11 // pred_check
          %p212 = pneg %p106
        $region14: #{tpu_custom_call.1} parent=11 // pred_check_branch
          %214 = sbr.rel (%p212) target = $region16
        $region15: #{tpu_custom_call.1} parent=11 // pred_region
          _
        $region16: #{tpu_custom_call.1} parent=11 // pred_fallthru
          _
        // Predicated region
        $region17: #{tpu_custom_call.1} parent=11 // pred_check
          %p215 = pneg %p127
        $region18: #{tpu_custom_call.1} parent=11 // pred_check_branch
          %217 = sbr.rel (%p215) target = $region20
        $region19: #{tpu_custom_call.1} parent=11 // pred_region
          _
        $region20: #{tpu_custom_call.1} parent=11 // pred_fallthru
          _
        // Predicated region
        $region21: #{tpu_custom_call.1} parent=11 // pred_check
          %p218 = pneg %p148
        $region22: #{tpu_custom_call.1} parent=11 // pred_check_branch
          %220 = sbr.rel (%p218) target = $region24
        $region23: #{tpu_custom_call.1} parent=11 // pred_region
          _
        $region24: #{tpu_custom_call.1} parent=11 // pred_fallthru
          _
        // Predicated region
        $region25: #{tpu_custom_call.1} parent=11 // pred_check
          %p221 = pneg %p169
        $region26: #{tpu_custom_call.1} parent=11 // pred_check_branch
          %223 = sbr.rel (%p221) target = $region28
        $region27: #{tpu_custom_call.1} parent=11 // pred_region
          _
        $region28: #{tpu_custom_call.1} parent=11 // pred_fallthru
          _
      $region12: #{tpu_custom_call.1} parent=5 // pred_fallthru
        _
      %p224 = scmp.lt.s32.totalorder %s15, 2
      // Predicated region
      $region29: #{tpu_custom_call.1} parent=5 // pred_check
        %p225 = pneg %p224
      $region30: #{tpu_custom_call.1} parent=5 // pred_check_branch
        %227 = sbr.rel (%p225) target = $region32
      $region31: #{tpu_custom_call.1} parent=5 // pred_region
        // Predicated region
        $region33: #{tpu_custom_call.1} parent=31 // pred_check
          %p228 = pneg %p49
        $region34: #{tpu_custom_call.1} parent=31 // pred_check_branch
          %230 = sbr.rel (%p228) target = $region36
        $region35: #{tpu_custom_call.1} parent=31 // pred_region
          %s231 = sand.u32 %s39, 1
          %s232 = sand.u32 %s39, 1
          %s233 = smul.addr %s232, 8
          %s234 = scalar_lea.vmem [#allocation2], %s233
          %s235 = smul.addr %s22, 4
          %s236 = sadd.s32 %s23, %s235
          %s237 = smul.addr %s236, 4
          %s238 = scalar_lea.vmem %s0, %s237
          // Predicated region
          $region37: #{tpu_custom_call.1} parent=35 // pred_check
            _
          $region38: #{tpu_custom_call.1} parent=35 // pred_check_branch
            %240 = sbr.rel (0) target = $region40
          $region39: #{tpu_custom_call.1} parent=35 // pred_region
            // Predicated region
            $region41: #{tpu_custom_call.1} parent=39 // pred_check
              _
            $region42: #{tpu_custom_call.1} parent=39 // pred_check_branch
              %242 = sbr.rel target = $region44
            $region43: #{tpu_custom_call.1} parent=39 // pred_region
              // Predicated region
              $region56: #{tpu_custom_call.1} parent=43 // pred_check
                _
              $region57: #{tpu_custom_call.1} parent=43 // pred_check_branch
                %259 = sbr.rel (0) target = $region59
              $region58: #{tpu_custom_call.1} parent=43 // pred_region
                loop: start=0, step=1, limit=1
                $region60: #{tpu_custom_call.1} parent=58 // loop_pre_header
                  _
                $region61: #{tpu_custom_call.1} parent=58 // loop_header
                  %s261 = sphi 0, %s265
                  %p262 = scmp.ge.s32.totalorder %s261, 1
                  %s266 = sphi %s238, %s238
                  %s267 = sphi %s234, %s234
                $region62: #{tpu_custom_call.1} parent=58 // loop_header_branch
                  %264 = sbr.rel (%p262) target = $region66
                $region63: #{tpu_custom_call.1} parent=58 // loop_body
                  _
                $region64: #{tpu_custom_call.1} parent=58 // loop_footer
                  %s265 = sadd.s32 1, %s261
                $region65: #{tpu_custom_call.1} parent=58 // loop_footer_branch
                  %260 = sbr.rel target = $region61
                $region66: #{tpu_custom_call.1} parent=58 // loop_exit
                  _
                loop: start=0, step=1, limit=1
                $region67: #{tpu_custom_call.1} parent=58 // loop_pre_header
                  _
                $region68: #{tpu_custom_call.1} parent=58 // loop_header
                  %s270 = sphi 0, %s274
                  %p271 = scmp.ge.s32.totalorder %s270, 1
                  %s275 = sphi %s238, %s238
                  %s276 = sphi %s234, %s234
                $region69: #{tpu_custom_call.1} parent=58 // loop_header_branch
                  %273 = sbr.rel (%p271) target = $region73
                $region70: #{tpu_custom_call.1} parent=58 // loop_body
                  %v277 = vld [vmem:[%s275] sm:$0xf]
                  %278 = vst [vmem:[%s276] sm:$0xf] %v277
                  %v279 = vld [vmem:[%s275 + $0x8] sm:$0xf]
                  %280 = vst [vmem:[%s276 + $0x4] sm:$0xf] %v279
                $region71: #{tpu_custom_call.1} parent=58 // loop_footer
                  %s274 = sadd.s32 1, %s270
                $region72: #{tpu_custom_call.1} parent=58 // loop_footer_branch
                  %269 = sbr.rel target = $region68
                $region73: #{tpu_custom_call.1} parent=58 // loop_exit
                  _
              $region59: #{tpu_custom_call.1} parent=43 // pred_fallthru
                _
            $region44: #{tpu_custom_call.1} parent=39 // pred_fallthru
              _
            // Predicated region
            $region45: #{tpu_custom_call.1} parent=39 // pred_check
              _
            $region46: #{tpu_custom_call.1} parent=39 // pred_check_branch
              %244 = sbr.rel (0) target = $region48
            $region47: #{tpu_custom_call.1} parent=39 // pred_region
              loop: start=0, step=1, limit=1
              $region49: #{tpu_custom_call.1} parent=47 // loop_pre_header
                _
              $region50: #{tpu_custom_call.1} parent=47 // loop_header
                %s247 = sphi 0, %s251
                %p248 = scmp.ge.s32.totalorder %s247, 1
                %s252 = sphi %s238, %s238
                %s253 = sphi %s234, %s234
              $region51: #{tpu_custom_call.1} parent=47 // loop_header_branch
                %250 = sbr.rel (%p248) target = $region55
              $region52: #{tpu_custom_call.1} parent=47 // loop_body
                %v254 = vld [vmem:[%s252] sm:$0xf]
                %255 = vst [vmem:[%s253] sm:$0xf] %v254
                %v256 = vld [vmem:[%s252 + $0x8] sm:$0xf]
                %257 = vst [vmem:[%s253 + $0x4] sm:$0xf] %v256
              $region53: #{tpu_custom_call.1} parent=47 // loop_footer
                %s251 = sadd.s32 1, %s247
              $region54: #{tpu_custom_call.1} parent=47 // loop_footer_branch
                %246 = sbr.rel target = $region50
              $region55: #{tpu_custom_call.1} parent=47 // loop_exit
                _
            $region48: #{tpu_custom_call.1} parent=39 // pred_fallthru
              _
          $region40: #{tpu_custom_call.1} parent=35 // pred_fallthru
            _
          %281 = vnop
        $region36: #{tpu_custom_call.1} parent=31 // pred_fallthru
          _
        // Predicated region
        $region74: #{tpu_custom_call.1} parent=31 // pred_check
          %p282 = pneg %p79
        $region75: #{tpu_custom_call.1} parent=31 // pred_check_branch
          %284 = sbr.rel (%p282) target = $region77
        $region76: #{tpu_custom_call.1} parent=31 // pred_region
          %s285 = sand.u32 %s69, 1
          %s286 = sand.u32 %s69, 1
          %s287 = smul.addr %s286, 8
          %s288 = scalar_lea.vmem [#allocation3], %s287
          %s289 = sadd.s32 %s23, 1
          %s290 = smul.addr %s22, 4
          %s291 = sadd.s32 %s289, %s290
          %s292 = smul.addr %s291, 4
          %s293 = scalar_lea.vmem %s1, %s292
          // Predicated region
          $region78: #{tpu_custom_call.1} parent=76 // pred_check
            _
          $region79: #{tpu_custom_call.1} parent=76 // pred_check_branch
            %295 = sbr.rel (0) target = $region81
          $region80: #{tpu_custom_call.1} parent=76 // pred_region
            // Predicated region
            $region82: #{tpu_custom_call.1} parent=80 // pred_check
              _
            $region83: #{tpu_custom_call.1} parent=80 // pred_check_branch
              %297 = sbr.rel target = $region85
            $region84: #{tpu_custom_call.1} parent=80 // pred_region
              // Predicated region
              $region97: #{tpu_custom_call.1} parent=84 // pred_check
                _
              $region98: #{tpu_custom_call.1} parent=84 // pred_check_branch
                %314 = sbr.rel (0) target = $region100
              $region99: #{tpu_custom_call.1} parent=84 // pred_region
                loop: start=0, step=1, limit=1
                $region101: #{tpu_custom_call.1} parent=99 // loop_pre_header
                  _
                $region102: #{tpu_custom_call.1} parent=99 // loop_header
                  %s316 = sphi 0, %s320
                  %p317 = scmp.ge.s32.totalorder %s316, 1
                  %s321 = sphi %s293, %s293
                  %s322 = sphi %s288, %s288
                $region103: #{tpu_custom_call.1} parent=99 // loop_header_branch
                  %319 = sbr.rel (%p317) target = $region107
                $region104: #{tpu_custom_call.1} parent=99 // loop_body
                  _
                $region105: #{tpu_custom_call.1} parent=99 // loop_footer
                  %s320 = sadd.s32 1, %s316
                $region106: #{tpu_custom_call.1} parent=99 // loop_footer_branch
                  %315 = sbr.rel target = $region102
                $region107: #{tpu_custom_call.1} parent=99 // loop_exit
                  _
                loop: start=0, step=1, limit=1
                $region108: #{tpu_custom_call.1} parent=99 // loop_pre_header
                  _
                $region109: #{tpu_custom_call.1} parent=99 // loop_header
                  %s325 = sphi 0, %s329
                  %p326 = scmp.ge.s32.totalorder %s325, 1
                  %s330 = sphi %s293, %s293
                  %s331 = sphi %s288, %s288
                $region110: #{tpu_custom_call.1} parent=99 // loop_header_branch
                  %328 = sbr.rel (%p326) target = $region114
                $region111: #{tpu_custom_call.1} parent=99 // loop_body
                  %v332 = vld [vmem:[%s330] sm:$0xf]
                  %333 = vst [vmem:[%s331] sm:$0xf] %v332
                  %v334 = vld [vmem:[%s330 + $0x8] sm:$0xf]
                  %335 = vst [vmem:[%s331 + $0x4] sm:$0xf] %v334
                $region112: #{tpu_custom_call.1} parent=99 // loop_footer
                  %s329 = sadd.s32 1, %s325
                $region113: #{tpu_custom_call.1} parent=99 // loop_footer_branch
                  %324 = sbr.rel target = $region109
                $region114: #{tpu_custom_call.1} parent=99 // loop_exit
                  _
              $region100: #{tpu_custom_call.1} parent=84 // pred_fallthru
                _
            $region85: #{tpu_custom_call.1} parent=80 // pred_fallthru
              _
            // Predicated region
            $region86: #{tpu_custom_call.1} parent=80 // pred_check
              _
            $region87: #{tpu_custom_call.1} parent=80 // pred_check_branch
              %299 = sbr.rel (0) target = $region89
            $region88: #{tpu_custom_call.1} parent=80 // pred_region
              loop: start=0, step=1, limit=1
              $region90: #{tpu_custom_call.1} parent=88 // loop_pre_header
                _
              $region91: #{tpu_custom_call.1} parent=88 // loop_header
                %s302 = sphi 0, %s306
                %p303 = scmp.ge.s32.totalorder %s302, 1
                %s307 = sphi %s293, %s293
                %s308 = sphi %s288, %s288
              $region92: #{tpu_custom_call.1} parent=88 // loop_header_branch
                %305 = sbr.rel (%p303) target = $region96
              $region93: #{tpu_custom_call.1} parent=88 // loop_body
                %v309 = vld [vmem:[%s307] sm:$0xf]
                %310 = vst [vmem:[%s308] sm:$0xf] %v309
                %v311 = vld [vmem:[%s307 + $0x8] sm:$0xf]
                %312 = vst [vmem:[%s308 + $0x4] sm:$0xf] %v311
              $region94: #{tpu_custom_call.1} parent=88 // loop_footer
                %s306 = sadd.s32 1, %s302
              $region95: #{tpu_custom_call.1} parent=88 // loop_footer_branch
                %301 = sbr.rel target = $region91
              $region96: #{tpu_custom_call.1} parent=88 // loop_exit
                _
            $region89: #{tpu_custom_call.1} parent=80 // pred_fallthru
              _
          $region81: #{tpu_custom_call.1} parent=76 // pred_fallthru
            _
          %336 = vnop
        $region77: #{tpu_custom_call.1} parent=31 // pred_fallthru
          _
      $region32: #{tpu_custom_call.1} parent=5 // pred_fallthru
        _
      %p337 = scmp.le.s32.totalorder 1, %s15
      %p338 = scmp.lt.s32.totalorder %s15, 3
      %p339 = pnand %p337, %p338
      %p340 = pneg %p339
      // Predicated region
      $region115: #{tpu_custom_call.1} parent=5 // pred_check
        _
      $region116: #{tpu_custom_call.1} parent=5 // pred_check_branch
        %342 = sbr.rel (%p339) target = $region118
      $region117: #{tpu_custom_call.1} parent=5 // pred_region
        %s343 = ssub.s32 %s15, 1
        %s344 = sand.u32 %s42, 1
        %s345 = sand.u32 %s42, 1
        %s346 = smul.addr %s345, 8
        %s347 = scalar_lea.vmem [#allocation2], %s346
        // Predicated region
        $region119: #{tpu_custom_call.1} parent=117 // pred_check
          %p348 = pneg %p55
        $region120: #{tpu_custom_call.1} parent=117 // pred_check_branch
          %350 = sbr.rel (%p348) target = $region122
        $region121: #{tpu_custom_call.1} parent=117 // pred_region
          _
        $region122: #{tpu_custom_call.1} parent=117 // pred_fallthru
          _
        %s351 = sand.u32 %s72, 1
        %s352 = sand.u32 %s72, 1
        %s353 = smul.addr %s352, 8
        %s354 = scalar_lea.vmem [#allocation3], %s353
        // Predicated region
        $region123: #{tpu_custom_call.1} parent=117 // pred_check
          %p355 = pneg %p85
        $region124: #{tpu_custom_call.1} parent=117 // pred_check_branch
          %357 = sbr.rel (%p355) target = $region126
        $region125: #{tpu_custom_call.1} parent=117 // pred_region
          _
        $region126: #{tpu_custom_call.1} parent=117 // pred_fallthru
          _
        %s358 = sand.u32 %s42, 1
        %s359 = sand.u32 %s42, 1
        %s360 = smul.addr %s359, 8
        %s361 = scalar_lea.vmem [#allocation2], %s360
        %p362 = pneg %p55
        %p363 = pneg %p52
        %s364 = sand.u32 %s72, 1
        %s365 = sand.u32 %s72, 1
        %s366 = smul.addr %s365, 8
        %s367 = scalar_lea.vmem [#allocation3], %s366
        %p368 = pneg %p85
        %p369 = pneg %p82
        %p370 = pneg %p106
        %p371 = pneg %p103
        %p372 = pneg %p127
        %p373 = pneg %p124
        %p374 = pneg %p148
        %p375 = pneg %p145
        %p376 = pneg %p169
        %p377 = pneg %p166
        %p378 = pneg %p197
        %p379 = pneg %p194
        %s380 = sand.u32 %s184, 1
        %s381 = scalar_lea.sflag [#allocation5], %s380
        %s382 = sand.u32 %s184, 1
        %s383 = smul.addr %s382, 2
        %s384 = scalar_lea.vmem [#allocation4], %s383
        %s385 = sadd.s32 %s25, 1
        %v386 = vld [vmem:[%s347] sm:$0xf]
        %s387 = scalar_lea.vmem %s347, 4 [#allocation2]
        %v388 = vld [vmem:[%s387] sm:$0xf]
        %v389 = vld [vmem:[%s354] sm:$0xf]
        %390 = vrot.lane.b32.xlu0 %v386, 127
        %v391 = vpop.permute.xlu0 %390
        %392 = vrot.lane.b32.xlu0 %v389, 127
        %v393 = vpop.permute.xlu0 %392
        %v394 = vlaneseq
        %v395 = vand.u32 %v394, 127
        %vm396 = vcmp.lt.s32.totalorder %v395, 127
        %v397 = vsel %vm396, %v391, %v393
        %s398 = scalar_lea.vmem %s354, 4 [#allocation3]
        %v399 = vld [vmem:[%s398] sm:$0xf]
        %400 = vrot.lane.b32.xlu0 %v388, 127
        %v401 = vpop.permute.xlu0 %400
        %402 = vrot.lane.b32.xlu0 %v399, 127
        %v403 = vpop.permute.xlu0 %402
        %v404 = vsel %vm396, %v401, %v403
        %v406 = vrot.slane %v388, 4
        %v409 = vrot.slane %v404, 4
        %vm411 = vcmask 1043456
        %v412 = vsel %vm411, %v386, %v406
        %v413 = vsel %vm411, %v397, %v409
        %v414 = vld [vmem:[%s2] sm:$0xff]
        %v415 = vld [vmem:[%s2 + $0x8] sm:$0xff]
        %v416 = vld [vmem:[%s2 + $0x10] sm:$0xff]
        %v417 = vld [vmem:[%s2 + $0x18] sm:$0xff]
        %v418 = vld [vmem:[%s2 + $0x20] sm:$0xff]
        %v419 = vld [vmem:[%s2 + $0x28] sm:$0xff]
        %v420 = vld [vmem:[%s2 + $0x30] sm:$0xff]
        %v421 = vld [vmem:[%s2 + $0x38] sm:$0xff]
        %v422 = vld [vmem:[%s3] sm:$0xff]
        %v423 = vld [vmem:[%s3 + $0x8] sm:$0xff]
        %v424 = vld [vmem:[%s3 + $0x10] sm:$0xff]
        %v425 = vld [vmem:[%s3 + $0x18] sm:$0xff]
        %v426 = vld [vmem:[%s3 + $0x20] sm:$0xff]
        %v427 = vld [vmem:[%s3 + $0x28] sm:$0xff]
        %v428 = vld [vmem:[%s3 + $0x30] sm:$0xff]
        %v429 = vld [vmem:[%s3 + $0x38] sm:$0xff]
        %431 = vset.pattern.permute.xlu0 0
        %432 = vperm.xlu0 %431, %v422
        %v433 = vpop.permute.xlu0 %432
        %436 = vset.pattern.permute.xlu0 0
        %437 = vperm.xlu0 %436, %v423
        %v438 = vpop.permute.xlu0 %437
        %441 = vset.pattern.permute.xlu0 0
        %442 = vperm.xlu0 %441, %v424
        %v443 = vpop.permute.xlu0 %442
        %446 = vset.pattern.permute.xlu0 0
        %447 = vperm.xlu0 %446, %v425
        %v448 = vpop.permute.xlu0 %447
        %451 = vset.pattern.permute.xlu0 0
        %452 = vperm.xlu0 %451, %v426
        %v453 = vpop.permute.xlu0 %452
        %456 = vset.pattern.permute.xlu0 0
        %457 = vperm.xlu0 %456, %v427
        %v458 = vpop.permute.xlu0 %457
        %461 = vset.pattern.permute.xlu0 0
        %462 = vperm.xlu0 %461, %v428
        %v463 = vpop.permute.xlu0 %462
        %466 = vset.pattern.permute.xlu0 0
        %467 = vperm.xlu0 %466, %v429
        %v468 = vpop.permute.xlu0 %467
        %vm470 = vcmask 130048
        %v472 = vsel %vm470, %v414, 0
        %v475 = vsel %vm470, %v415, 0
        %v478 = vsel %vm470, %v416, 0
        %v481 = vsel %vm470, %v417, 0
        %v484 = vsel %vm470, %v418, 0
        %v487 = vsel %vm470, %v419, 0
        %v490 = vsel %vm470, %v420, 0
        %v493 = vsel %vm470, %v421, 0
        %495 = vmatprep.subr.mxu0 0.0
        %496 = vmatpush1.msra.mxu0 %v412
        %497 = vmatprep.subr.mxu0 0.0
        %498 = vmatpush1.msra.mxu0 %v413
        %499 = vmatprep.subr.mxu0 0.0
        %500 = vmatpush1.msra.mxu0 0.0
        %501 = vmatprep.subr.mxu0 0.0
        %502 = vmatpush1.msra.mxu0 0.0
        %503 = vmatprep.subr.mxu0 0.0
        %504 = vmatpush1.msra.mxu0 0.0
        %505 = vmatprep.subr.mxu0 0.0
        %506 = vmatpush1.msra.mxu0 0.0
        %507 = vmatprep.subr.mxu0 0.0
        %508 = vmatpush1.msra.mxu0 0.0
        %509 = vmatprep.subr.mxu0 0.0
        %510 = vmatpush1.msra.mxu0 0.0
        %511 = vmatprep.subr.mxu0 0.0
        %512 = vmatpush1.msra.mxu0 0.0
        %513 = vmatprep.subr.mxu0 0.0
        %514 = vmatpush1.msra.mxu0 0.0
        %515 = vmatprep.subr.mxu0 0.0
        %516 = vmatpush1.msra.mxu0 0.0
        %517 = vmatprep.subr.mxu0 0.0
        %518 = vmatpush1.msra.mxu0 0.0
        %519 = vmatprep.subr.mxu0 0.0
        %520 = vmatpush1.msra.mxu0 0.0
        %521 = vmatprep.subr.mxu0 0.0
        %522 = vmatpush1.msra.mxu0 0.0
        %523 = vmatprep.subr.mxu0 0.0
        %524 = vmatpush1.msra.mxu0 0.0
        %525 = vmatprep.subr.mxu0 0.0
        %526 = vmatpush1.msra.mxu0 0.0
        %527 = vmatprep.subr.mxu0 0.0
        %528 = vmatpush1.msra.mxu0 0.0
        %529 = vmatprep.subr.mxu0 0.0
        %530 = vmatpush1.msra.mxu0 0.0
        %531 = vmatprep.subr.mxu0 0.0
        %532 = vmatpush1.msra.mxu0 0.0
        %533 = vmatprep.subr.mxu0 0.0
        %534 = vmatpush1.msra.mxu0 0.0
        %535 = vmatprep.subr.mxu0 0.0
        %536 = vmatpush1.msra.mxu0 0.0
        %537 = vmatprep.subr.mxu0 0.0
        %538 = vmatpush1.msra.mxu0 0.0
        %539 = vmatprep.subr.mxu0 0.0
        %540 = vmatpush1.msra.mxu0 0.0
        %541 = vmatprep.subr.mxu0 0.0
        %542 = vmatpush1.msra.mxu0 0.0
        %543 = vmatprep.subr.mxu0 0.0
        %544 = vmatpush1.msra.mxu0 0.0
        %545 = vmatprep.subr.mxu0 0.0
        %546 = vmatpush1.msra.mxu0 0.0
        %547 = vmatprep.subr.mxu0 0.0
        %548 = vmatpush1.msra.mxu0 0.0
        %549 = vmatprep.subr.mxu0 0.0
        %550 = vmatpush1.msra.mxu0 0.0
        %551 = vmatprep.subr.mxu0 0.0
        %552 = vmatpush1.msra.mxu0 0.0
        %553 = vmatprep.subr.mxu0 0.0
        %554 = vmatpush1.msra.mxu0 0.0
        %555 = vmatprep.subr.mxu0 0.0
        %556 = vmatpush1.msra.mxu0 0.0
        %557 = vmatprep.subr.mxu0 0.0
        %558 = vmatpush1.msra.mxu0 0.0
        %559 = vmatprep.mubr.f32.mxu0 0.0
        %560 = vmatmul.mubr.f32.gmra.mrb[0].mxu0 %v472
        %v561 = vpop.f32.mrb[0].mxu0
        %v562 = vadd.f32 %v433, %v561
        %v563 = vpop.f32.mrb[0].mxu0
        %564 = vmatprep.mubr.f32.mxu0 0.0
        %565 = vmatmul.mubr.f32.gmra.mrb[0].mxu0 %v475
        %v566 = vpop.f32.mrb[0].mxu0
        %v567 = vadd.f32 %v438, %v566
        %v568 = vpop.f32.mrb[0].mxu0
        %569 = vmatprep.mubr.f32.mxu0 0.0
        %570 = vmatmul.mubr.f32.gmra.mrb[0].mxu0 %v478
        %v571 = vpop.f32.mrb[0].mxu0
        %v572 = vadd.f32 %v443, %v571
        %v573 = vpop.f32.mrb[0].mxu0
        %574 = vmatprep.mubr.f32.mxu0 0.0
        %575 = vmatmul.mubr.f32.gmra.mrb[0].mxu0 %v481
        %v576 = vpop.f32.mrb[0].mxu0
        %v577 = vadd.f32 %v448, %v576
        %v578 = vpop.f32.mrb[0].mxu0
        %579 = vmatprep.mubr.f32.mxu0 0.0
        %580 = vmatmul.mubr.f32.gmra.mrb[0].mxu0 %v484
        %v581 = vpop.f32.mrb[0].mxu0
        %v582 = vadd.f32 %v453, %v581
        %v583 = vpop.f32.mrb[0].mxu0
        %584 = vmatprep.mubr.f32.mxu0 0.0
        %585 = vmatmul.mubr.f32.gmra.mrb[0].mxu0 %v487
        %v586 = vpop.f32.mrb[0].mxu0
        %v587 = vadd.f32 %v458, %v586
        %v588 = vpop.f32.mrb[0].mxu0
        %589 = vmatprep.mubr.f32.mxu0 0.0
        %590 = vmatmul.mubr.f32.gmra.mrb[0].mxu0 %v490
        %v591 = vpop.f32.mrb[0].mxu0
        %v592 = vadd.f32 %v463, %v591
        %v593 = vpop.f32.mrb[0].mxu0
        %594 = vmatprep.mubr.f32.mxu0 0.0
        %595 = vmatmul.mubr.f32.gmra.mrb[0].mxu0 %v493
        %v596 = vpop.f32.mrb[0].mxu0
        %v597 = vadd.f32 %v468, %v596
        %v598 = vpop.f32.mrb[0].mxu0
        %599 = vdwg.mxu0
        %v600 = vmul.f32 %v562, 0.5
        %v601 = vmul.f32 %v567, 0.5
        %v602 = vmul.f32 %v572, 0.5
        %v603 = vmul.f32 %v577, 0.5
        %v604 = vmul.f32 %v582, 0.5
        %v605 = vmul.f32 %v587, 0.5
        %v606 = vmul.f32 %v592, 0.5
        %v607 = vmul.f32 %v597, 0.5
        %v608 = vmul.f32 %v562, 0.70710677
        %v609 = vmul.f32 %v567, 0.70710677
        %v610 = vmul.f32 %v572, 0.70710677
        %v611 = vmul.f32 %v577, 0.70710677
        %v612 = vmul.f32 %v582, 0.70710677
        %v613 = vmul.f32 %v587, 0.70710677
        %v614 = vmul.f32 %v592, 0.70710677
        %v615 = vmul.f32 %v597, 0.70710677
        %v616 = verf.f32.pop %v608
        %v617 = verf.f32.pop %v609
        %v618 = verf.f32.pop %v610
        %v619 = verf.f32.pop %v611
        %v620 = verf.f32.pop %v612
        %v621 = verf.f32.pop %v613
        %v622 = verf.f32.pop %v614
        %v623 = verf.f32.pop %v615
        %v624 = vadd.f32 %v616, 1.0
        %v625 = vadd.f32 %v617, 1.0
        %v626 = vadd.f32 %v618, 1.0
        %v627 = vadd.f32 %v619, 1.0
        %v628 = vadd.f32 %v620, 1.0
        %v629 = vadd.f32 %v621, 1.0
        %v630 = vadd.f32 %v622, 1.0
        %v631 = vadd.f32 %v623, 1.0
        %v632 = vmul.f32 %v600, %v624
        %v633 = vmul.f32 %v601, %v625
        %v634 = vmul.f32 %v602, %v626
        %v635 = vmul.f32 %v603, %v627
        %v636 = vmul.f32 %v604, %v628
        %v637 = vmul.f32 %v605, %v629
        %v638 = vmul.f32 %v606, %v630
        %v639 = vmul.f32 %v607, %v631
        %v640 = vld [vmem:[%s4] sm:$0x3]
        %v641 = vld [vmem:[%s5] sm:$0x3]
        %643 = vset.pattern.permute.xlu0 0
        %644 = vperm.xlu0 %643, %v641
        %v645 = vpop.permute.xlu0 %644
        %vm647 = vcmask 523264
        %v649 = vsel %vm647, %v640, 0
        %651 = vmatprep.subr.mxu0 0.0
        %652 = vmatpush1.msra.mxu0 %v632
        %653 = vmatprep.subr.mxu0 0.0
        %654 = vmatpush1.msra.mxu0 %v633
        %655 = vmatprep.subr.mxu0 0.0
        %656 = vmatpush1.msra.mxu0 %v634
        %657 = vmatprep.subr.mxu0 0.0
        %658 = vmatpush1.msra.mxu0 %v635
        %659 = vmatprep.subr.mxu0 0.0
        %660 = vmatpush1.msra.mxu0 %v636
        %661 = vmatprep.subr.mxu0 0.0
        %662 = vmatpush1.msra.mxu0 %v637
        %663 = vmatprep.subr.mxu0 0.0
        %664 = vmatpush1.msra.mxu0 %v638
        %665 = vmatprep.subr.mxu0 0.0
        %666 = vmatpush1.msra.mxu0 %v639
        %667 = vmatprep.subr.mxu0 0.0
        %668 = vmatpush1.msra.mxu0 0.0
        %669 = vmatprep.subr.mxu0 0.0
        %670 = vmatpush1.msra.mxu0 0.0
        %671 = vmatprep.subr.mxu0 0.0
        %672 = vmatpush1.msra.mxu0 0.0
        %673 = vmatprep.subr.mxu0 0.0
        %674 = vmatpush1.msra.mxu0 0.0
        %675 = vmatprep.subr.mxu0 0.0
        %676 = vmatpush1.msra.mxu0 0.0
        %677 = vmatprep.subr.mxu0 0.0
        %678 = vmatpush1.msra.mxu0 0.0
        %679 = vmatprep.subr.mxu0 0.0
        %680 = vmatpush1.msra.mxu0 0.0
        %681 = vmatprep.subr.mxu0 0.0
        %682 = vmatpush1.msra.mxu0 0.0
        %683 = vmatprep.subr.mxu0 0.0
        %684 = vmatpush1.msra.mxu0 0.0
        %685 = vmatprep.subr.mxu0 0.0
        %686 = vmatpush1.msra.mxu0 0.0
        %687 = vmatprep.subr.mxu0 0.0
        %688 = vmatpush1.msra.mxu0 0.0
        %689 = vmatprep.subr.mxu0 0.0
        %690 = vmatpush1.msra.mxu0 0.0
        %691 = vmatprep.subr.mxu0 0.0
        %692 = vmatpush1.msra.mxu0 0.0
        %693 = vmatprep.subr.mxu0 0.0
        %694 = vmatpush1.msra.mxu0 0.0
        %695 = vmatprep.subr.mxu0 0.0
        %696 = vmatpush1.msra.mxu0 0.0
        %697 = vmatprep.subr.mxu0 0.0
        %698 = vmatpush1.msra.mxu0 0.0
        %699 = vmatprep.subr.mxu0 0.0
        %700 = vmatpush1.msra.mxu0 0.0
        %701 = vmatprep.subr.mxu0 0.0
        %702 = vmatpush1.msra.mxu0 0.0
        %703 = vmatprep.subr.mxu0 0.0
        %704 = vmatpush1.msra.mxu0 0.0
        %705 = vmatprep.subr.mxu0 0.0
        %706 = vmatpush1.msra.mxu0 0.0
        %707 = vmatprep.subr.mxu0 0.0
        %708 = vmatpush1.msra.mxu0 0.0
        %709 = vmatprep.subr.mxu0 0.0
        %710 = vmatpush1.msra.mxu0 0.0
        %711 = vmatprep.subr.mxu0 0.0
        %712 = vmatpush1.msra.mxu0 0.0
        %713 = vmatprep.subr.mxu0 0.0
        %714 = vmatpush1.msra.mxu0 0.0
        %715 = vmatprep.mubr.f32.mxu0 0.0
        %716 = vmatmul.mubr.f32.gmra.mrb[0].mxu0 %v649
        %v717 = vpop.f32.mrb[0].mxu0
        %v718 = vadd.f32 %v645, %v717
        %v719 = vpop.f32.mrb[0].mxu0
        %720 = vdwg.mxu0
        %721 = vst [vmem:[%s384] sm:$0x3] %v718
        %s722 = sand.u32 %s184, 1
        %s723 = scalar_lea.sflag [#allocation5], %s722
        %s724 = sand.u32 %s184, 1
        %s725 = smul.addr %s724, 2
        %s726 = scalar_lea.vmem [#allocation4], %s725
        // Predicated region
        $region127: #{tpu_custom_call.1} parent=117 // pred_check
          %p727 = pneg %p194
        $region128: #{tpu_custom_call.1} parent=117 // pred_check_branch
          %729 = sbr.rel (%p727) target = $region130
        $region129: #{tpu_custom_call.1} parent=117 // pred_region
          %s731 = ssub.s32 32, 32
          %732 = vsyncadd %s723, %s731
          %s733 = sadd.s32 %s25, %s24
          %s734 = smul.addr %s733, 32
          %s735 = scalar_lea.hbm %s6, %s734
          %s737 = sshll.u32 %s726, 4
          %s738 = int_to_ptr.vmem [resolvable:$true] %s737
          %740 = dma.vmem_to_hbm [thread:$0]  %s738, 32, %s735, %s723
        $region130: #{tpu_custom_call.1} parent=117 // pred_fallthru
          _
      $region118: #{tpu_custom_call.1} parent=5 // pred_fallthru
        _
      %p741 = scmp.le.s32.totalorder 2, %s15
      // Predicated region
      $region131: #{tpu_custom_call.1} parent=5 // pred_check
        %p742 = pneg %p741
      $region132: #{tpu_custom_call.1} parent=5 // pred_check_branch
        %744 = sbr.rel (%p742) target = $region134
      $region133: #{tpu_custom_call.1} parent=5 // pred_region
        %s745 = ssub.s32 %s15, 2
        // Predicated region
        $region135: #{tpu_custom_call.1} parent=133 // pred_check
          %p746 = pneg %p200
        $region136: #{tpu_custom_call.1} parent=133 // pred_check_branch
          %748 = sbr.rel (%p746) target = $region138
        $region137: #{tpu_custom_call.1} parent=133 // pred_region
          %s749 = sand.u32 %s185, 1
          %s750 = scalar_lea.sflag [#allocation5], %s749
          %s751 = sand.u32 %s185, 1
          %s752 = smul.addr %s751, 2
          %s753 = scalar_lea.vmem [#allocation4], %s752
          %754 = dma.done %s750, 32
        $region138: #{tpu_custom_call.1} parent=133 // pred_fallthru
          _
      $region134: #{tpu_custom_call.1} parent=5 // pred_fallthru
        _
    $region6: #{tpu_custom_call.1} parent=1 // loop_footer
      %s19 = sadd.s32 1, %s15
    $region7: #{tpu_custom_call.1} parent=1 // loop_footer_branch
      %14 = sbr.rel target = $region3
    $region8: #{tpu_custom_call.1} parent=1 // loop_exit
      _
    %755 = vsyncpa [#allocation5], 1
    %s756 = scalar_lea.sflag [#allocation5], 1
    %757 = vsyncpa %s756, 1

</llo_original>
